<compile_context>
chip_gen: v5e
topology: v5e:2x2
jax: 0.10.0
libtpu: 0.0.40
codegen_flags: <defaults>
</compile_context>

<pallas_src>
import functools

import jax
import jax.numpy as jnp
from jax.experimental import pallas as pl
from jax.experimental.pallas import tpu as pltpu


def _round_up(x: int, m: int) -> int:
    return (x + m - 1) // m * m


def actor_ppo_kernel(x_ref, w1_ref, b1_ref, w2_ref, b2_ref,
                     w3_ref, b3_ref, w4_ref, b4_ref, out_ref):
    # x: (TB, state_dim) f32   weights: bf16   biases: f32
    x = x_ref[...].astype(jnp.bfloat16)

    # Linear 1 + ReLU  (bf16 matmul, f32 accumulate; activation math in f32)
    h = jnp.dot(x, w1_ref[...], preferred_element_type=jnp.float32) + b1_ref[...]
    h = jnp.maximum(h, 0.0).astype(jnp.bfloat16)

    # Linear 2 + ReLU
    h = jnp.dot(h, w2_ref[...], preferred_element_type=jnp.float32) + b2_ref[...]
    h = jnp.maximum(h, 0.0).astype(jnp.bfloat16)

    # Linear 3 + Hardswish: x * clamp(x + 3, 0, 6) / 6
    h = jnp.dot(h, w3_ref[...], preferred_element_type=jnp.float32) + b3_ref[...]
    h = (h * jnp.clip(h + 3.0, 0.0, 6.0) * (1.0 / 6.0)).astype(jnp.bfloat16)

    # Linear 4 + tanh  (output lanes == action_dim, no padding)
    h = jnp.dot(h, w4_ref[...], preferred_element_type=jnp.float32) + b4_ref[...]
    out_ref[...] = jnp.tanh(h).astype(out_ref.dtype)


def prepare_params(params):
    """One-time (per parameter set) pad + cast, kept OUT of the per-call forward.

    Layout:
      w1: (state_dim, md_p) bf16   b1/b2/b3: (1, md_p) f32
      w2, w3: (md_p, md_p)  bf16   w4: (md_p, action_dim) bf16
      b4: (1, action_dim)   f32
    md_p = mid_dim rounded up to 128 (lane-dense; do NOT pad further -> wasted MXU).
    Padded rows/cols are zero, so they propagate zeros through ReLU/Hardswish.
    """
    state_dim = params["w1"].shape[0]
    mid_dim = params["w1"].shape[1]
    action_dim = params["w4"].shape[1]
    md_p = _round_up(mid_dim, 128)

    def pad_w(w, rows, cols):
        return jnp.pad(w, ((0, rows - w.shape[0]), (0, cols - w.shape[1]))
                       ).astype(jnp.bfloat16)

    def pad_b(b, cols):
        return jnp.pad(b, ((0, 0), (0, cols - b.shape[1]))).astype(jnp.float32)

    return {
        "w1": pad_w(params["w1"], state_dim, md_p), "b1": pad_b(params["b1"], md_p),
        "w2": pad_w(params["w2"], md_p, md_p),      "b2": pad_b(params["b2"], md_p),
        "w3": pad_w(params["w3"], md_p, md_p),      "b3": pad_b(params["b3"], md_p),
        "w4": pad_w(params["w4"], md_p, action_dim),
        "b4": params["b4"].astype(jnp.float32),
    }


@functools.partial(jax.jit, static_argnames=("tb",))
def actor_ppo_forward(state, prepped, *, tb=1024):
    """Fused MLP forward.

    state:   (B, state_dim) f32
    prepped: output of prepare_params().
    Returns  (B, action_dim) f32.
    """
    B, state_dim = state.shape
    md_p = prepped["w1"].shape[1]
    action_dim = prepped["w4"].shape[1]

    # Batch tile: cap at `tb`, keep it a multiple of 8, and aim for >=2 grid steps
    # (v7x megacore) while overshooting B by less than one tile.
    n_tiles = max(pl.cdiv(B, tb), 2)
    TB = min(tb, _round_up(pl.cdiv(B, n_tiles), 8))
    if TB > B:
        TB = B  # single block equal to the full batch dim (legal full-dim block)
    grid = (pl.cdiv(B, TB),)

    # Explicit per-argument specs. Weights/biases use constant index_maps, so they
    # are DMA'd once and stay VMEM-resident across all batch tiles.
    in_specs = [
        pl.BlockSpec((TB, state_dim), lambda i: (i, 0)),      # state streams
        pl.BlockSpec((state_dim, md_p), lambda i: (0, 0)),    # w1 resident
        pl.BlockSpec((1, md_p), lambda i: (0, 0)),            # b1
        pl.BlockSpec((md_p, md_p), lambda i: (0, 0)),         # w2
        pl.BlockSpec((1, md_p), lambda i: (0, 0)),            # b2
        pl.BlockSpec((md_p, md_p), lambda i: (0, 0)),         # w3
        pl.BlockSpec((1, md_p), lambda i: (0, 0)),            # b3
        pl.BlockSpec((md_p, action_dim), lambda i: (0, 0)),   # w4
        pl.BlockSpec((1, action_dim), lambda i: (0, 0)),      # b4
    ]
    out_specs = pl.BlockSpec((TB, action_dim), lambda i: (i, 0))

    return pl.pallas_call(
        actor_ppo_kernel,
        out_shape=jax.ShapeDtypeStruct((B, action_dim), jnp.float32),
        grid=grid,
        in_specs=in_specs,
        out_specs=out_specs,
        compiler_params=pltpu.CompilerParams(
            dimension_semantics=("parallel",),   # megacore sharding on v7x
        ),
    )(state, prepped["w1"], prepped["b1"], prepped["w2"], prepped["b2"],
      prepped["w3"], prepped["b3"], prepped["w4"], prepped["b4"])


def init_params(key, state_dim, mid_dim, action_dim):
    """Deterministic synthetic init (shapes match the PyTorch module, weights transposed)."""
    ks = jax.random.split(key, 8)

    def lin(kw, kb, fan_in, fan_out):
        bound = 1.0 / jnp.sqrt(fan_in)
        w = jax.random.uniform(kw, (fan_in, fan_out), jnp.float32, -bound, bound)
        b = jax.random.uniform(kb, (1, fan_out), jnp.float32, -bound, bound)
        return w, b

    w1, b1 = lin(ks[0], ks[1], state_dim, mid_dim)
    w2, b2 = lin(ks[2], ks[3], mid_dim, mid_dim)
    w3, b3 = lin(ks[4], ks[5], mid_dim, mid_dim)
    w4, b4 = lin(ks[6], ks[7], mid_dim, action_dim)
    return {"w1": w1, "b1": b1, "w2": w2, "b2": b2,
            "w3": w3, "b3": b3, "w4": w4, "b4": b4}


def reference_forward(state, p):
    """Pure-JAX f32 reference (matches PyTorch ActorPPO.forward)."""
    h = jnp.maximum(state @ p["w1"] + p["b1"], 0.0)
    h = jnp.maximum(h @ p["w2"] + p["b2"], 0.0)
    h = h @ p["w3"] + p["b3"]
    h = h * jnp.clip(h + 3.0, 0.0, 6.0) / 6.0
    h = h @ p["w4"] + p["b4"]
    return jnp.tanh(h)


if __name__ == "__main__":
    key = jax.random.PRNGKey(0)
    k_state, k_state2, k_params = jax.random.split(key, 3)

    batch, state_dim, mid_dim, action_dim = 8, 16, 32, 4

    params = init_params(k_params, state_dim, mid_dim, action_dim)
    prepped = prepare_params(params)          # one-time pad/cast, reused every call

    # Small single-tile case.
    state = jax.random.normal(k_state, (batch, state_dim), jnp.float32)
    out = jax.block_until_ready(actor_ppo_forward(state, prepped))
    ref = reference_forward(state, params)
    assert out.shape == (batch, action_dim)
    # bf16 matmuls / bf16 intermediates with f32 accumulation -> loosened tolerance.
    assert jnp.allclose(out, ref, atol=2e-2, rtol=2e-2), (
        f"max abs err {jnp.max(jnp.abs(out - ref))}")

    # Multi-tile case with a partial last tile (exercises masked edge block).
    state2 = jax.random.normal(k_state2, (20, state_dim), jnp.float32)
    out2 = jax.block_until_ready(actor_ppo_forward(state2, prepped))
    ref2 = reference_forward(state2, params)
    assert out2.shape == (20, action_dim)
    assert jnp.allclose(out2, ref2, atol=2e-2, rtol=2e-2), (
        f"max abs err {jnp.max(jnp.abs(out2 - ref2))}")

    # TODO(synk): get_action / get_logprob_entropy / get_old_logprob (Gaussian
    # sampling and log-prob reductions using a_std_log) are not part of forward()
    # and are left unimplemented.
    print("KERNEL_OK")
</pallas_src>

<mosaic_0001>
module attributes {stable_mosaic.version = 11 : i64} {
  func.func @actor_ppo_kernel(%arg0: i32, %arg1: memref<8x16xf32, #tpu.memory_space<vmem>>, %arg2: memref<16x128xbf16, #tpu.memory_space<vmem>>, %arg3: memref<1x128xf32, #tpu.memory_space<vmem>>, %arg4: memref<128x128xbf16, #tpu.memory_space<vmem>>, %arg5: memref<1x128xf32, #tpu.memory_space<vmem>>, %arg6: memref<128x128xbf16, #tpu.memory_space<vmem>>, %arg7: memref<1x128xf32, #tpu.memory_space<vmem>>, %arg8: memref<128x4xbf16, #tpu.memory_space<vmem>>, %arg9: memref<1x4xf32, #tpu.memory_space<vmem>>, %arg10: memref<8x4xf32, #tpu.memory_space<vmem>>) attributes {dimension_semantics = [#tpu.dimension_semantics<parallel>], iteration_bounds = array<i64: 1>, scalar_prefetch = 0 : i64, scratch_operands = 0 : i64, tpu.core_type = #tpu.core_type<tc>, window_params = [{transform_indices = @transform_0, window_bounds = array<i64: 8, 16>}, {pipeline_mode = #tpu.pipeline_mode<synchronous>, transform_indices = @transform_1, window_bounds = array<i64: 16, 128>}, {pipeline_mode = #tpu.pipeline_mode<synchronous>, transform_indices = @transform_2, window_bounds = array<i64: 1, 128>}, {pipeline_mode = #tpu.pipeline_mode<synchronous>, transform_indices = @transform_3, window_bounds = array<i64: 128, 128>}, {pipeline_mode = #tpu.pipeline_mode<synchronous>, transform_indices = @transform_4, window_bounds = array<i64: 1, 128>}, {pipeline_mode = #tpu.pipeline_mode<synchronous>, transform_indices = @transform_5, window_bounds = array<i64: 128, 128>}, {pipeline_mode = #tpu.pipeline_mode<synchronous>, transform_indices = @transform_6, window_bounds = array<i64: 1, 128>}, {pipeline_mode = #tpu.pipeline_mode<synchronous>, transform_indices = @transform_7, window_bounds = array<i64: 128, 4>}, {pipeline_mode = #tpu.pipeline_mode<synchronous>, transform_indices = @transform_8, window_bounds = array<i64: 1, 4>}, {transform_indices = @transform_9, window_bounds = array<i64: 8, 4>}]} {
    %c0 = arith.constant 0 : index
    %c0_0 = arith.constant 0 : index
    %0 = vector.load %arg1[%c0, %c0_0] : memref<8x16xf32, #tpu.memory_space<vmem>>, vector<8x16xf32>
    %1 = arith.truncf %0 : vector<8x16xf32> to vector<8x16xbf16>
    %c0_1 = arith.constant 0 : index
    %c0_2 = arith.constant 0 : index
    %2 = vector.load %arg2[%c0_1, %c0_2] : memref<16x128xbf16, #tpu.memory_space<vmem>>, vector<16x128xbf16>
    %cst = arith.constant dense<0.000000e+00> : vector<8x128xf32>
    %3 = tpu.matmul %1, %2, %cst {dimension_numbers = #tpu.dot_dimension_numbers<[1], [0], [0], [1], [0, 0, 1, 1], [], []>} : vector<8x16xbf16>, vector<16x128xbf16>, vector<8x128xf32> -> vector<8x128xf32>
    %c0_3 = arith.constant 0 : index
    %c0_4 = arith.constant 0 : index
    %4 = vector.load %arg3[%c0_3, %c0_4] : memref<1x128xf32, #tpu.memory_space<vmem>>, vector<1x128xf32>
    %5 = vector.broadcast %4 : vector<1x128xf32> to vector<8x128xf32>
    %6 = arith.addf %3, %5 : vector<8x128xf32>
    %cst_5 = arith.constant 0.000000e+00 : f32
    %7 = vector.broadcast %cst_5 : f32 to vector<8x128xf32>
    %8 = arith.maximumf %6, %7 : vector<8x128xf32>
    %9 = arith.truncf %8 : vector<8x128xf32> to vector<8x128xbf16>
    %c0_6 = arith.constant 0 : index
    %c0_7 = arith.constant 0 : index
    %10 = vector.load %arg4[%c0_6, %c0_7] : memref<128x128xbf16, #tpu.memory_space<vmem>>, vector<128x128xbf16>
    %cst_8 = arith.constant dense<0.000000e+00> : vector<8x128xf32>
    %11 = tpu.matmul %9, %10, %cst_8 {dimension_numbers = #tpu.dot_dimension_numbers<[1], [0], [0], [1], [0, 0, 1, 1], [], []>} : vector<8x128xbf16>, vector<128x128xbf16>, vector<8x128xf32> -> vector<8x128xf32>
    %c0_9 = arith.constant 0 : index
    %c0_10 = arith.constant 0 : index
    %12 = vector.load %arg5[%c0_9, %c0_10] : memref<1x128xf32, #tpu.memory_space<vmem>>, vector<1x128xf32>
    %13 = vector.broadcast %12 : vector<1x128xf32> to vector<8x128xf32>
    %14 = arith.addf %11, %13 : vector<8x128xf32>
    %cst_11 = arith.constant 0.000000e+00 : f32
    %15 = vector.broadcast %cst_11 : f32 to vector<8x128xf32>
    %16 = arith.maximumf %14, %15 : vector<8x128xf32>
    %17 = arith.truncf %16 : vector<8x128xf32> to vector<8x128xbf16>
    %c0_12 = arith.constant 0 : index
    %c0_13 = arith.constant 0 : index
    %18 = vector.load %arg6[%c0_12, %c0_13] : memref<128x128xbf16, #tpu.memory_space<vmem>>, vector<128x128xbf16>
    %cst_14 = arith.constant dense<0.000000e+00> : vector<8x128xf32>
    %19 = tpu.matmul %17, %18, %cst_14 {dimension_numbers = #tpu.dot_dimension_numbers<[1], [0], [0], [1], [0, 0, 1, 1], [], []>} : vector<8x128xbf16>, vector<128x128xbf16>, vector<8x128xf32> -> vector<8x128xf32>
    %c0_15 = arith.constant 0 : index
    %c0_16 = arith.constant 0 : index
    %20 = vector.load %arg7[%c0_15, %c0_16] : memref<1x128xf32, #tpu.memory_space<vmem>>, vector<1x128xf32>
    %21 = vector.broadcast %20 : vector<1x128xf32> to vector<8x128xf32>
    %22 = arith.addf %19, %21 : vector<8x128xf32>
    %cst_17 = arith.constant 3.000000e+00 : f32
    %23 = vector.broadcast %cst_17 : f32 to vector<8x128xf32>
    %24 = arith.addf %22, %23 : vector<8x128xf32>
    %cst_18 = arith.constant 0.000000e+00 : f32
    %cst_19 = arith.constant 6.000000e+00 : f32
    %25 = vector.broadcast %cst_18 : f32 to vector<8x128xf32>
    %26 = arith.maximumf %25, %24 : vector<8x128xf32>
    %27 = vector.broadcast %cst_19 : f32 to vector<8x128xf32>
    %28 = arith.minimumf %27, %26 : vector<8x128xf32>
    %29 = arith.mulf %22, %28 : vector<8x128xf32>
    %cst_20 = arith.constant 0.166666672 : f32
    %30 = vector.broadcast %cst_20 : f32 to vector<8x128xf32>
    %31 = arith.mulf %29, %30 : vector<8x128xf32>
    %32 = arith.truncf %31 : vector<8x128xf32> to vector<8x128xbf16>
    %c0_21 = arith.constant 0 : index
    %c0_22 = arith.constant 0 : index
    %33 = vector.load %arg8[%c0_21, %c0_22] : memref<128x4xbf16, #tpu.memory_space<vmem>>, vector<128x4xbf16>
    %cst_23 = arith.constant dense<0.000000e+00> : vector<8x4xf32>
    %34 = tpu.matmul %32, %33, %cst_23 {dimension_numbers = #tpu.dot_dimension_numbers<[1], [0], [0], [1], [0, 0, 1, 1], [], []>} : vector<8x128xbf16>, vector<128x4xbf16>, vector<8x4xf32> -> vector<8x4xf32>
    %c0_24 = arith.constant 0 : index
    %c0_25 = arith.constant 0 : index
    %35 = vector.load %arg9[%c0_24, %c0_25] : memref<1x4xf32, #tpu.memory_space<vmem>>, vector<1x4xf32>
    %36 = vector.broadcast %35 : vector<1x4xf32> to vector<8x4xf32>
    %37 = arith.addf %34, %36 : vector<8x4xf32>
    %38 = math.tanh %37 : vector<8x4xf32>
    %c0_26 = arith.constant 0 : index
    %c0_27 = arith.constant 0 : index
    %39 = vector.load %arg10[%c0_26, %c0_27] : memref<8x4xf32, #tpu.memory_space<vmem>>, vector<8x4xf32>
    tpu.vector_store %arg10[%c0_26, %c0_27], %38 {strides = array<i32>} : memref<8x4xf32, #tpu.memory_space<vmem>>, vector<8x4xf32>,
    return
  }
  func.func @transform_0(%arg0: i32) -> (i32, i32) {
    %c0_i32 = arith.constant 0 : i32
    %c0_i32_0 = arith.constant 0 : i32
    return %arg0, %c0_i32 : i32, i32
  }
  func.func @transform_1(%arg0: i32) -> (i32, i32) {
    %c0_i32 = arith.constant 0 : i32
    %c0_i32_0 = arith.constant 0 : i32
    %c0_i32_1 = arith.constant 0 : i32
    return %c0_i32, %c0_i32_0 : i32, i32
  }
  func.func @transform_2(%arg0: i32) -> (i32, i32) {
    %c0_i32 = arith.constant 0 : i32
    %c0_i32_0 = arith.constant 0 : i32
    %c0_i32_1 = arith.constant 0 : i32
    return %c0_i32, %c0_i32_0 : i32, i32
  }
  func.func @transform_3(%arg0: i32) -> (i32, i32) {
    %c0_i32 = arith.constant 0 : i32
    %c0_i32_0 = arith.constant 0 : i32
    %c0_i32_1 = arith.constant 0 : i32
    return %c0_i32, %c0_i32_0 : i32, i32
  }
  func.func @transform_4(%arg0: i32) -> (i32, i32) {
    %c0_i32 = arith.constant 0 : i32
    %c0_i32_0 = arith.constant 0 : i32
    %c0_i32_1 = arith.constant 0 : i32
    return %c0_i32, %c0_i32_0 : i32, i32
  }
  func.func @transform_5(%arg0: i32) -> (i32, i32) {
    %c0_i32 = arith.constant 0 : i32
    %c0_i32_0 = arith.constant 0 : i32
    %c0_i32_1 = arith.constant 0 : i32
    return %c0_i32, %c0_i32_0 : i32, i32
  }
  func.func @transform_6(%arg0: i32) -> (i32, i32) {
    %c0_i32 = arith.constant 0 : i32
    %c0_i32_0 = arith.constant 0 : i32
    %c0_i32_1 = arith.constant 0 : i32
    return %c0_i32, %c0_i32_0 : i32, i32
  }
  func.func @transform_7(%arg0: i32) -> (i32, i32) {
    %c0_i32 = arith.constant 0 : i32
    %c0_i32_0 = arith.constant 0 : i32
    %c0_i32_1 = arith.constant 0 : i32
    return %c0_i32, %c0_i32_0 : i32, i32
  }
  func.func @transform_8(%arg0: i32) -> (i32, i32) {
    %c0_i32 = arith.constant 0 : i32
    %c0_i32_0 = arith.constant 0 : i32
    %c0_i32_1 = arith.constant 0 : i32
    return %c0_i32, %c0_i32_0 : i32, i32
  }
  func.func @transform_9(%arg0: i32) -> (i32, i32) {
    %c0_i32 = arith.constant 0 : i32
    %c0_i32_0 = arith.constant 0 : i32
    return %arg0, %c0_i32 : i32, i32
  }
}

</mosaic_0001>

<llo_original>
// kernel: actor_ppo_forward.1
$region0: #{actor_ppo_forward.1}
  #allocation0 [shape = 'u32[]', space=smem, size = 0x4, offset = 0x4, fixed_abs, tag = 'smem constant byte address 0x4 - core index']
  #allocation1 [shape = 'u32[72,128]{1,0:T(1,128)}', space=vmem, size = 0x9000, scoped, tag = 'internal scratch']
  %s0 = inlined_call_operand.hbm [shape: f32[8,16], index: 0, kind: input, shape index: {}]
  %s1 = inlined_call_operand.hbm [shape: bf16[16,128], index: 1, kind: input, shape index: {}]
  %s2 = inlined_call_operand.vmem [shape: f32[1,128], index: 2, kind: input, shape index: {}]
  %s3 = inlined_call_operand.vmem [shape: bf16[128,128], index: 3, kind: input, shape index: {}]
  %s4 = inlined_call_operand.vmem [shape: f32[1,128], index: 4, kind: input, shape index: {}]
  %s5 = inlined_call_operand.hbm [shape: bf16[128,128], index: 5, kind: input, shape index: {}]
  %s6 = inlined_call_operand.vmem [shape: f32[1,128], index: 6, kind: input, shape index: {}]
  %s7 = inlined_call_operand.vmem [shape: bf16[128,4], index: 7, kind: input, shape index: {}]
  %s8 = inlined_call_operand.hbm [shape: f32[1,4], index: 8, kind: input, shape index: {}]
  %s9 = inlined_call_operand.vmem [shape: f32[8,4], index: 9, kind: output, shape index: {}]
  %s10 = sld [smem:[#allocation0]]
  $region62: #{actor_ppo_forward.1} parent=0
    _
  %s12 = ssub.s32 1, %s10
  %s13 = scalar_select 0, %s12, %s10
  $region1: #{actor_ppo_forward.1} parent=0
    #allocation2 [shape = 'u8[4096]{0}', space=vmem, size = 0x1000, scoped, tag = 'input window, operand 0, single buffered']
    #allocation3 [shape = 's32[1]{0}', space=sflag, size = 0x4, scoped, tag = 'scoped memory for actor_ppo_forward.1']
    #allocation4 [shape = 'u8[4096]{0}', space=vmem, size = 0x1000, scoped, tag = 'input window, operand 1, single buffered']
    #allocation5 [shape = 's32[1]{0}', space=sflag, size = 0x4, scoped, tag = 'scoped memory for actor_ppo_forward.1']
    #allocation6 [shape = 'u8[32768]{0}', space=vmem, size = 0x8000, scoped, tag = 'input window, operand 5, single buffered']
    #allocation7 [shape = 'u8[512]{0}', space=vmem, size = 0x400, scoped, tag = 'input window, operand 8, single buffered']
    #allocation8 [shape = 's32[1]{0}', space=sflag, size = 0x4, scoped, tag = 'scoped memory for actor_ppo_forward.1']
    %14 = vsyncpa [#allocation3], 0
    %15 = vsyncpa [#allocation5], 0
    %16 = vsyncpa [#allocation8], 0
    // Predicated region
    $region2: #{actor_ppo_forward.1} parent=1 // pred_check
      _
    $region3: #{actor_ppo_forward.1} parent=1 // pred_check_branch
      %18 = sbr.rel (0) target = $region5
    $region4: #{actor_ppo_forward.1} parent=1 // pred_region
      %20 = vsyncadd [#allocation3], 0
      %s22 = sshll.u32 %s0, 4
      %s23 = int_to_ptr.hbm [resolvable:$true] %s22
      %s24 = sshll.u32 [#allocation2], 4
      %s25 = int_to_ptr.vmem [resolvable:$true] %s24
      %27 = dma.hbm_to_vmem [thread:$0]  %s23, 128, %s25, [#allocation3]
    $region5: #{actor_ppo_forward.1} parent=1 // pred_fallthru
      _
    // Predicated region
    $region6: #{actor_ppo_forward.1} parent=1 // pred_check
      _
    $region7: #{actor_ppo_forward.1} parent=1 // pred_check_branch
      %29 = sbr.rel (0) target = $region9
    $region8: #{actor_ppo_forward.1} parent=1 // pred_region
      %31 = vsyncadd [#allocation5], 0
      %s32 = sshll.u32 %s1, 4
      %s33 = int_to_ptr.hbm [resolvable:$true] %s32
      %s34 = sshll.u32 [#allocation4], 4
      %s35 = int_to_ptr.vmem [resolvable:$true] %s34
      %40 = dma.hbm_to_vmem [thread:$0]  %s33, 128, %s35, [#allocation5], 64, 64, 4
    $region9: #{actor_ppo_forward.1} parent=1 // pred_fallthru
      _
    // Predicated region
    $region10: #{actor_ppo_forward.1} parent=1 // pred_check
      _
    $region11: #{actor_ppo_forward.1} parent=1 // pred_check_branch
      %42 = sbr.rel (0) target = $region13
    $region12: #{actor_ppo_forward.1} parent=1 // pred_region
      _
    $region13: #{actor_ppo_forward.1} parent=1 // pred_fallthru
      _
    // Predicated region
    $region14: #{actor_ppo_forward.1} parent=1 // pred_check
      _
    $region15: #{actor_ppo_forward.1} parent=1 // pred_check_branch
      %44 = sbr.rel (0) target = $region17
    $region16: #{actor_ppo_forward.1} parent=1 // pred_region
      _
    $region17: #{actor_ppo_forward.1} parent=1 // pred_fallthru
      _
    // Predicated region
    $region18: #{actor_ppo_forward.1} parent=1 // pred_check
      _
    $region19: #{actor_ppo_forward.1} parent=1 // pred_check_branch
      %46 = sbr.rel (0) target = $region21
    $region20: #{actor_ppo_forward.1} parent=1 // pred_region
      _
    $region21: #{actor_ppo_forward.1} parent=1 // pred_fallthru
      _
    // Predicated region
    $region22: #{actor_ppo_forward.1} parent=1 // pred_check
      _
    $region23: #{actor_ppo_forward.1} parent=1 // pred_check_branch
      %48 = sbr.rel (0) target = $region25
    $region24: #{actor_ppo_forward.1} parent=1 // pred_region
      %50 = vsyncadd [#allocation5], 0
      %s51 = sshll.u32 %s5, 4
      %s52 = int_to_ptr.hbm [resolvable:$true] %s51
      %s53 = sshll.u32 [#allocation6], 4
      %s54 = int_to_ptr.vmem [resolvable:$true] %s53
      %59 = dma.hbm_to_vmem [thread:$0]  %s52, 1024, %s54, [#allocation5], 64, 64, 4
    $region25: #{actor_ppo_forward.1} parent=1 // pred_fallthru
      _
    // Predicated region
    $region26: #{actor_ppo_forward.1} parent=1 // pred_check
      _
    $region27: #{actor_ppo_forward.1} parent=1 // pred_check_branch
      %61 = sbr.rel (0) target = $region29
    $region28: #{actor_ppo_forward.1} parent=1 // pred_region
      _
    $region29: #{actor_ppo_forward.1} parent=1 // pred_fallthru
      _
    // Predicated region
    $region30: #{actor_ppo_forward.1} parent=1 // pred_check
      _
    $region31: #{actor_ppo_forward.1} parent=1 // pred_check_branch
      %63 = sbr.rel (0) target = $region33
    $region32: #{actor_ppo_forward.1} parent=1 // pred_region
      _
    $region33: #{actor_ppo_forward.1} parent=1 // pred_fallthru
      _
    // Predicated region
    $region34: #{actor_ppo_forward.1} parent=1 // pred_check
      _
    $region35: #{actor_ppo_forward.1} parent=1 // pred_check_branch
      %65 = sbr.rel (0) target = $region37
    $region36: #{actor_ppo_forward.1} parent=1 // pred_region
      %67 = vsyncadd [#allocation8], 0
      %s69 = sshll.u32 %s8, 4
      %s70 = int_to_ptr.hbm [resolvable:$true] %s69
      %s71 = sshll.u32 [#allocation7], 4
      %s72 = int_to_ptr.vmem [resolvable:$true] %s71
      %74 = dma.hbm_to_vmem [thread:$0]  %s70, 16, %s72, [#allocation8]
    $region37: #{actor_ppo_forward.1} parent=1 // pred_fallthru
      _
    // Predicated region
    $region38: #{actor_ppo_forward.1} parent=1 // pred_check
      _
    $region39: #{actor_ppo_forward.1} parent=1 // pred_check_branch
      %76 = sbr.rel (0) target = $region41
    $region40: #{actor_ppo_forward.1} parent=1 // pred_region
      %78 = dma.done [#allocation3], 128
    $region41: #{actor_ppo_forward.1} parent=1 // pred_fallthru
      _
    // Predicated region
    $region42: #{actor_ppo_forward.1} parent=1 // pred_check
      _
    $region43: #{actor_ppo_forward.1} parent=1 // pred_check_branch
      %80 = sbr.rel (0) target = $region45
    $region44: #{actor_ppo_forward.1} parent=1 // pred_region
      %82 = dma.done [#allocation5], 128
    $region45: #{actor_ppo_forward.1} parent=1 // pred_fallthru
      _
    // Predicated region
    $region46: #{actor_ppo_forward.1} parent=1 // pred_check
      _
    $region47: #{actor_ppo_forward.1} parent=1 // pred_check_branch
      %84 = sbr.rel (0) target = $region49
    $region48: #{actor_ppo_forward.1} parent=1 // pred_region
      %86 = dma.done [#allocation5], 1024
    $region49: #{actor_ppo_forward.1} parent=1 // pred_fallthru
      _
    // Predicated region
    $region50: #{actor_ppo_forward.1} parent=1 // pred_check
      _
    $region51: #{actor_ppo_forward.1} parent=1 // pred_check_branch
      %88 = sbr.rel (0) target = $region53
    $region52: #{actor_ppo_forward.1} parent=1 // pred_region
      %90 = dma.done [#allocation8], 16
    $region53: #{actor_ppo_forward.1} parent=1 // pred_fallthru
      _
    %v92 = vld [vmem:[#allocation2] sm:$0xff]
    %v93 = vpack.c.bf16 %v92, %v92
    %v94 = vld [vmem:[#allocation4] sm:$0xf]
    %v95 = vld [vmem:[#allocation4 + $0x4] sm:$0xf]
    %v96 = vld [vmem:[%s2] sm:$0x1]
    %v98 = vperm.slane %v96, 0
    %v102 = vunpack.c.l.b16 %v94
    %v103 = vunpack.c.l.b16 %v95
    %v104 = vpack.c.b16 %v103, %v102
    %vm106 = vcmask 130048
    %v108 = vsel %vm106, %v93, 0
    %110 = vmatpush.bf16.msra.mxu0 0
    %111 = vmatpush.bf16.msra.mxu0 0
    %112 = vmatpush.bf16.msra.mxu0 0
    %113 = vmatpush.bf16.msra.mxu0 0
    %114 = vmatpush.bf16.msra.mxu0 0
    %115 = vmatpush.bf16.msra.mxu0 0
    %116 = vmatpush.bf16.msra.mxu0 0
    %117 = vmatpush.bf16.msra.mxu0 %v104
    %118 = vmatmul.bf16.gmra.mxu0 %v108
    %v119 = vpop.f32.mrf.mxu0
    %v120 = vadd.f32 %v98, %v119
    %v121 = vpop.f32.mrf.mxu0
    %122 = vdwg.mxu0
    %v123 = vmax.f32 %v120, 0.0
    %v124 = vpack.c.bf16 %v123, %v123
    %v125 = vld [vmem:[%s3] sm:$0xf]
    %v126 = vld [vmem:[%s3 + $0x4] sm:$0xf]
    %v127 = vld [vmem:[%s3 + $0x8] sm:$0xf]
    %v128 = vld [vmem:[%s3 + $0xc] sm:$0xf]
    %v129 = vld [vmem:[%s3 + $0x10] sm:$0xf]
    %v130 = vld [vmem:[%s3 + $0x14] sm:$0xf]
    %v131 = vld [vmem:[%s3 + $0x18] sm:$0xf]
    %v132 = vld [vmem:[%s3 + $0x1c] sm:$0xf]
    %v133 = vld [vmem:[%s3 + $0x20] sm:$0xf]
    %v134 = vld [vmem:[%s3 + $0x24] sm:$0xf]
    %v135 = vld [vmem:[%s3 + $0x28] sm:$0xf]
    %v136 = vld [vmem:[%s3 + $0x2c] sm:$0xf]
    %v137 = vld [vmem:[%s3 + $0x30] sm:$0xf]
    %v138 = vld [vmem:[%s3 + $0x34] sm:$0xf]
    %v139 = vld [vmem:[%s3 + $0x38] sm:$0xf]
    %v140 = vld [vmem:[%s3 + $0x3c] sm:$0xf]
    %v141 = vld [vmem:[%s4] sm:$0x1]
    %v143 = vperm.slane %v141, 0
    %v161 = vunpack.c.l.b16 %v125
    %v162 = vunpack.c.l.b16 %v126
    %v163 = vunpack.c.l.b16 %v127
    %v164 = vunpack.c.l.b16 %v128
    %v165 = vunpack.c.l.b16 %v129
    %v166 = vunpack.c.l.b16 %v130
    %v167 = vunpack.c.l.b16 %v131
    %v168 = vunpack.c.l.b16 %v132
    %v169 = vunpack.c.l.b16 %v133
    %v170 = vunpack.c.l.b16 %v134
    %v171 = vunpack.c.l.b16 %v135
    %v172 = vunpack.c.l.b16 %v136
    %v173 = vunpack.c.l.b16 %v137
    %v174 = vunpack.c.l.b16 %v138
    %v175 = vunpack.c.l.b16 %v139
    %v176 = vunpack.c.l.b16 %v140
    %v177 = vpack.c.b16 %v162, %v161
    %v178 = vpack.c.b16 %v164, %v163
    %v179 = vpack.c.b16 %v166, %v165
    %v180 = vpack.c.b16 %v168, %v167
    %v181 = vpack.c.b16 %v170, %v169
    %v182 = vpack.c.b16 %v172, %v171
    %v183 = vpack.c.b16 %v174, %v173
    %v184 = vpack.c.b16 %v176, %v175
    %193 = vmatpush.bf16.msra.mxu0 %v184
    %194 = vmatpush.bf16.msra.mxu0 %v183
    %195 = vmatpush.bf16.msra.mxu0 %v182
    %196 = vmatpush.bf16.msra.mxu0 %v181
    %197 = vmatpush.bf16.msra.mxu0 %v180
    %198 = vmatpush.bf16.msra.mxu0 %v179
    %199 = vmatpush.bf16.msra.mxu0 %v178
    %200 = vmatpush.bf16.msra.mxu0 %v177
    %201 = vmatmul.bf16.gmra.mxu0 %v124
    %v202 = vpop.f32.mrf.mxu0
    %v203 = vadd.f32 %v143, %v202
    %v204 = vpop.f32.mrf.mxu0
    %205 = vdwg.mxu0
    %v206 = vmax.f32 %v203, 0.0
    %v207 = vpack.c.bf16 %v206, %v206
    %v208 = vld [vmem:[#allocation6] sm:$0xf]
    %v209 = vld [vmem:[#allocation6 + $0x4] sm:$0xf]
    %v210 = vld [vmem:[#allocation6 + $0x8] sm:$0xf]
    %v211 = vld [vmem:[#allocation6 + $0xc] sm:$0xf]
    %v212 = vld [vmem:[#allocation6 + $0x10] sm:$0xf]
    %v213 = vld [vmem:[#allocation6 + $0x14] sm:$0xf]
    %v214 = vld [vmem:[#allocation6 + $0x18] sm:$0xf]
    %v215 = vld [vmem:[#allocation6 + $0x1c] sm:$0xf]
    %v216 = vld [vmem:[#allocation6 + $0x20] sm:$0xf]
    %v217 = vld [vmem:[#allocation6 + $0x24] sm:$0xf]
    %v218 = vld [vmem:[#allocation6 + $0x28] sm:$0xf]
    %v219 = vld [vmem:[#allocation6 + $0x2c] sm:$0xf]
    %v220 = vld [vmem:[#allocation6 + $0x30] sm:$0xf]
    %v221 = vld [vmem:[#allocation6 + $0x34] sm:$0xf]
    %v222 = vld [vmem:[#allocation6 + $0x38] sm:$0xf]
    %v223 = vld [vmem:[#allocation6 + $0x3c] sm:$0xf]
    %v224 = vld [vmem:[%s6] sm:$0x1]
    %v226 = vperm.slane %v224, 0
    %v244 = vunpack.c.l.b16 %v208
    %v245 = vunpack.c.l.b16 %v209
    %v246 = vunpack.c.l.b16 %v210
    %v247 = vunpack.c.l.b16 %v211
    %v248 = vunpack.c.l.b16 %v212
    %v249 = vunpack.c.l.b16 %v213
    %v250 = vunpack.c.l.b16 %v214
    %v251 = vunpack.c.l.b16 %v215
    %v252 = vunpack.c.l.b16 %v216
    %v253 = vunpack.c.l.b16 %v217
    %v254 = vunpack.c.l.b16 %v218
    %v255 = vunpack.c.l.b16 %v219
    %v256 = vunpack.c.l.b16 %v220
    %v257 = vunpack.c.l.b16 %v221
    %v258 = vunpack.c.l.b16 %v222
    %v259 = vunpack.c.l.b16 %v223
    %v260 = vpack.c.b16 %v245, %v244
    %v261 = vpack.c.b16 %v247, %v246
    %v262 = vpack.c.b16 %v249, %v248
    %v263 = vpack.c.b16 %v251, %v250
    %v264 = vpack.c.b16 %v253, %v252
    %v265 = vpack.c.b16 %v255, %v254
    %v266 = vpack.c.b16 %v257, %v256
    %v267 = vpack.c.b16 %v259, %v258
    %276 = vmatpush.bf16.msra.mxu0 %v267
    %277 = vmatpush.bf16.msra.mxu0 %v266
    %278 = vmatpush.bf16.msra.mxu0 %v265
    %279 = vmatpush.bf16.msra.mxu0 %v264
    %280 = vmatpush.bf16.msra.mxu0 %v263
    %281 = vmatpush.bf16.msra.mxu0 %v262
    %282 = vmatpush.bf16.msra.mxu0 %v261
    %283 = vmatpush.bf16.msra.mxu0 %v260
    %284 = vmatmul.bf16.gmra.mxu0 %v207
    %v285 = vpop.f32.mrf.mxu0
    %v286 = vadd.f32 %v226, %v285
    %v287 = vpop.f32.mrf.mxu0
    %288 = vdwg.mxu0
    %v289 = vadd.f32 %v286, 3.0
    %v290 = vmax.f32 %v289, 0.0
    %v291 = vmin.f32 %v290, 6.0
    %v292 = vmul.f32 %v286, %v291
    %v293 = vmul.f32 %v292, 0.16666667
    %v294 = vpack.c.bf16 %v293, %v293
    %v295 = vld [vmem:[%s7] sm:$0xf]
    %v296 = vld [vmem:[%s7 + $0x4] sm:$0xf]
    %v297 = vld [vmem:[%s7 + $0x8] sm:$0xf]
    %v298 = vld [vmem:[%s7 + $0xc] sm:$0xf]
    %v299 = vld [vmem:[%s7 + $0x10] sm:$0xf]
    %v300 = vld [vmem:[%s7 + $0x14] sm:$0xf]
    %v301 = vld [vmem:[%s7 + $0x18] sm:$0xf]
    %v302 = vld [vmem:[%s7 + $0x1c] sm:$0xf]
    %v303 = vld [vmem:[%s7 + $0x20] sm:$0xf]
    %v304 = vld [vmem:[%s7 + $0x24] sm:$0xf]
    %v305 = vld [vmem:[%s7 + $0x28] sm:$0xf]
    %v306 = vld [vmem:[%s7 + $0x2c] sm:$0xf]
    %v307 = vld [vmem:[%s7 + $0x30] sm:$0xf]
    %v308 = vld [vmem:[%s7 + $0x34] sm:$0xf]
    %v309 = vld [vmem:[%s7 + $0x38] sm:$0xf]
    %v310 = vld [vmem:[%s7 + $0x3c] sm:$0xf]
    %v311 = vld [vmem:[#allocation7] sm:$0x1]
    %v313 = vperm.slane %v311, 0
    %v331 = vunpack.c.l.b16 %v295
    %v332 = vunpack.c.l.b16 %v296
    %v333 = vunpack.c.l.b16 %v297
    %v334 = vunpack.c.l.b16 %v298
    %v335 = vunpack.c.l.b16 %v299
    %v336 = vunpack.c.l.b16 %v300
    %v337 = vunpack.c.l.b16 %v301
    %v338 = vunpack.c.l.b16 %v302
    %v339 = vunpack.c.l.b16 %v303
    %v340 = vunpack.c.l.b16 %v304
    %v341 = vunpack.c.l.b16 %v305
    %v342 = vunpack.c.l.b16 %v306
    %v343 = vunpack.c.l.b16 %v307
    %v344 = vunpack.c.l.b16 %v308
    %v345 = vunpack.c.l.b16 %v309
    %v346 = vunpack.c.l.b16 %v310
    %v347 = vpack.c.b16 %v332, %v331
    %v348 = vpack.c.b16 %v334, %v333
    %v349 = vpack.c.b16 %v336, %v335
    %v350 = vpack.c.b16 %v338, %v337
    %v351 = vpack.c.b16 %v340, %v339
    %v352 = vpack.c.b16 %v342, %v341
    %v353 = vpack.c.b16 %v344, %v343
    %v354 = vpack.c.b16 %v346, %v345
    %363 = vmatpush.bf16.msra.mxu0 %v354
    %364 = vmatpush.bf16.msra.mxu0 %v353
    %365 = vmatpush.bf16.msra.mxu0 %v352
    %366 = vmatpush.bf16.msra.mxu0 %v351
    %367 = vmatpush.bf16.msra.mxu0 %v350
    %368 = vmatpush.bf16.msra.mxu0 %v349
    %369 = vmatpush.bf16.msra.mxu0 %v348
    %370 = vmatpush.bf16.msra.mxu0 %v347
    %371 = vmatmul.bf16.gmra.mxu0 %v294
    %v372 = vpop.f32.mrf.mxu0
    %v373 = vadd.f32 %v313, %v372
    %v374 = vpop.f32.mrf.mxu0
    %375 = vdwg.mxu0
    %v376 = vtanh.pop %v373
    %vm377 = vcmask 31744
    %378 = vst.msk [vmem:[%s9] sm:$0xff] %vm377, %v376
    // Predicated region
    $region54: #{actor_ppo_forward.1} parent=1 // pred_check
      _
    $region55: #{actor_ppo_forward.1} parent=1 // pred_check_branch
      %380 = sbr.rel (0) target = $region57
    $region56: #{actor_ppo_forward.1} parent=1 // pred_region
      _
    $region57: #{actor_ppo_forward.1} parent=1 // pred_fallthru
      _
    // Predicated region
    $region58: #{actor_ppo_forward.1} parent=1 // pred_check
      _
    $region59: #{actor_ppo_forward.1} parent=1 // pred_check_branch
      %382 = sbr.rel (0) target = $region61
    $region60: #{actor_ppo_forward.1} parent=1 // pred_region
      _
    $region61: #{actor_ppo_forward.1} parent=1 // pred_fallthru
      _
    %383 = vsyncpa [#allocation3], 1
    %384 = vsyncpa [#allocation5], 1
    %385 = vsyncpa [#allocation8], 1

</llo_original>
